<compile_context>
chip_gen: v7x
topology: tpu7x:2x2x1
jax: 0.10.0
libtpu: 0.0.40
codegen_flags: <defaults>
</compile_context>

<pallas_src>
import functools

import jax
import jax.numpy as jnp
from jax.experimental import pallas as pl
from jax.experimental.pallas import tpu as pltpu


def _coord_latent_body(xc_ref, wct_ref, bias_ref, o_ref, *, apply_tanh):
    # xc_ref  : (1, nt, 2)  spatial coords of one batch tile (points on sublanes)
    # wct_ref : (2, D)      fc_coord.weight transposed (shared across the grid)
    # bias_ref: (1, 1, D)   per-batch fused bias: fc_coord.bias + fc_latent(z)[b]
    # o_ref   : (1, nt, D)  output tile, point-major -> matches the (B*N, D)
    #                       return layout with no post-kernel transpose.
    xc = xc_ref[0]                       # (nt, 2)
    x0 = xc[:, 0:1]                      # (nt, 1)  x coordinate of every point
    x1 = xc[:, 1:2]                      # (nt, 1)  y coordinate of every point
    w0 = wct_ref[0:1, :]                 # (1, D)
    w1 = wct_ref[1:2, :]                 # (1, D)
    b = bias_ref[0]                      # (1, D)   bias + latent projection, fused

    # K=2 contraction as two VPU broadcast-FMAs (no MXU) + one fused bias add.
    h = x0 * w0 + x1 * w1 + b            # (nt, D), f32
    if apply_tanh:
        # jnp.tanh -> lax.tanh -> single EUP push per vreg (EUP slot is free
        # relative to the vst/HBM bound here).
        h = jnp.tanh(h)
    o_ref[0] = h.astype(o_ref.dtype)


_coord_latent_kernel_tanh = functools.partial(_coord_latent_body, apply_tanh=True)
_coord_latent_kernel_linear = functools.partial(_coord_latent_body, apply_tanh=False)


def _pick_point_tile(n_points, target=4096):
    """Largest multiple-of-8 divisor of n_points that is <= target.

    Keeps double-buffered coord+output blocks well under the scoped-VMEM limit
    on all of v5e/v6e/v7x while amortizing per-grid-step overhead.
    Falls back to a single full-extent block when no clean divisor exists
    (full-extent blocks are always (8,128)-legal).
    """
    if n_points <= target or n_points % 8 != 0:
        return n_points
    nt = target - (target % 8)
    while nt >= 8:
        if n_points % nt == 0:
            return nt
        nt -= 8
    return n_points


def coord_latent_forward(x_coord, z, w_coord, b_coord, w_latent,
                         activation_out=True):
    """Pallas implementation of coord_latent.forward.

    x_coord : (B, N, 2) float32  spatial coordinates
    z       : (B, L)    float32  latent vectors
    w_coord : (D, 2)    fc_coord.weight  (torch layout: (out_dim, 2))
    b_coord : (D,)      fc_coord.bias
    w_latent: (D, L)    fc_latent.weight (torch layout: (out_dim, latent_dim))
    returns : (B*N, D)  -- matches the PyTorch module's return layout
    """
    B, N, _ = x_coord.shape
    D = w_coord.shape[0]

    # Fuse the tiny latent projection and the coord bias OUTSIDE the grid:
    #   bias[b, d] = b_coord[d] + (z @ w_latent.T)[b, d]
    # (B*D elements total; removes a per-step 32x8x2 MXU matmul from the kernel.)
    bias = (z @ w_latent.T + b_coord[None, :]).reshape(B, 1, D)
    wct = w_coord.T                      # (2, D), trivially small

    nt = _pick_point_tile(N)
    grid_n = N // nt if N % nt == 0 else 1
    if grid_n * nt != N:                 # safety net: single full-extent tile
        nt, grid_n = N, 1

    kernel = _coord_latent_kernel_tanh if activation_out else _coord_latent_kernel_linear

    out = pl.pallas_call(
        kernel,
        out_shape=jax.ShapeDtypeStruct((B, N, D), x_coord.dtype),
        grid=(B, grid_n),
        in_specs=[
            pl.BlockSpec((1, nt, 2), lambda b, t: (b, t, 0)),   # coords tile
            pl.BlockSpec((2, D), lambda b, t: (0, 0)),          # W_coord^T (shared)
            pl.BlockSpec((1, 1, D), lambda b, t: (b, 0, 0)),    # fused bias (per batch)
        ],
        out_specs=pl.BlockSpec((1, nt, D), lambda b, t: (b, t, 0)),
        compiler_params=pltpu.CompilerParams(
            dimension_semantics=("parallel", "parallel"),
            vmem_limit_bytes=32 * 1024 * 1024),
    )(x_coord, wct, bias)

    # (B, N, D) -> (B*N, D): contiguous merge of leading dims, free (no HBM pass).
    return out.reshape(B * N, D)


if __name__ == "__main__":
    # Small shapes consistent with the module's forward:
    #   batch=2, n=256 spatial points (a 16x16 grid), latent_dim=8, out_dim=32
    B, N, L, D = 2, 256, 8, 32

    key = jax.random.PRNGKey(0)
    k_xc, k_z, k_wc, k_bc, k_wl = jax.random.split(key, 5)

    x_coord = jax.random.normal(k_xc, (B, N, 2), dtype=jnp.float32)
    z = jax.random.normal(k_z, (B, L), dtype=jnp.float32)

    # Parameters in torch nn.Linear layout: weight (out, in), bias (out,).
    w_coord = jax.random.normal(k_wc, (D, 2), dtype=jnp.float32) / jnp.sqrt(2.0)
    b_coord = jax.random.normal(k_bc, (D,), dtype=jnp.float32) * 0.1
    w_latent = jax.random.normal(k_wl, (D, L), dtype=jnp.float32) / jnp.sqrt(float(L))

    # Pure-JAX reference (same math as the PyTorch forward).
    h_x = x_coord.reshape(B * N, 2) @ w_coord.T + b_coord          # (B*N, D)
    h_z = z @ w_latent.T                                           # (B, D)
    ref_lin = (h_x.reshape(B, N, D) + h_z[:, None, :]).reshape(B * N, D)
    ref_tanh = jnp.tanh(ref_lin)

    # Tanh path (default module config).
    out = coord_latent_forward(x_coord, z, w_coord, b_coord, w_latent,
                               activation_out=True)
    out = jax.block_until_ready(out)
    assert out.shape == (B * N, D)
    assert jnp.allclose(out, ref_tanh, atol=1e-5, rtol=1e-5)

    # activation_out=False path.
    out_lin = coord_latent_forward(x_coord, z, w_coord, b_coord, w_latent,
                                   activation_out=False)
    out_lin = jax.block_until_ready(out_lin)
    assert jnp.allclose(out_lin, ref_lin, atol=1e-5, rtol=1e-5)

    print("KERNEL_OK")
</pallas_src>

<mosaic_0001>
module attributes {stable_mosaic.version = 11 : i64} {
  func.func @_coord_latent_body(%arg0: i32, %arg1: i32, %arg2: memref<1x256x2xf32, #tpu.memory_space<vmem>>, %arg3: memref<2x32xf32, #tpu.memory_space<vmem>>, %arg4: memref<1x1x32xf32, #tpu.memory_space<vmem>>, %arg5: memref<1x256x32xf32, #tpu.memory_space<vmem>>) attributes {dimension_semantics = [#tpu.dimension_semantics<parallel>, #tpu.dimension_semantics<parallel>], iteration_bounds = array<i64: 2, 1>, scalar_prefetch = 0 : i64, scratch_operands = 0 : i64, tpu.core_type = #tpu.core_type<tc>, window_params = [{transform_indices = @transform_0, window_bounds = array<i64: 1, 256, 2>}, {pipeline_mode = #tpu.pipeline_mode<synchronous>, transform_indices = @transform_1, window_bounds = array<i64: 2, 32>}, {transform_indices = @transform_2, window_bounds = array<i64: 1, 1, 32>}, {transform_indices = @transform_3, window_bounds = array<i64: 1, 256, 32>}]} {
    %c0 = arith.constant 0 : index
    %c0_0 = arith.constant 0 : index
    %c0_1 = arith.constant 0 : index
    %0 = vector.load %arg2[%c0, %c0_0, %c0_1] : memref<1x256x2xf32, #tpu.memory_space<vmem>>, vector<1x256x2xf32>
    %1 = vector.shape_cast %0 : vector<1x256x2xf32> to vector<256x2xf32>
    %2 = vector.extract_strided_slice %1 {offsets = [0, 0], sizes = [256, 1], strides = [1, 1]} : vector<256x2xf32> to vector<256x1xf32>
    %3 = vector.extract_strided_slice %1 {offsets = [0, 1], sizes = [256, 1], strides = [1, 1]} : vector<256x2xf32> to vector<256x1xf32>
    %c0_2 = arith.constant 0 : index
    %c0_3 = arith.constant 0 : index
    %4 = vector.load %arg3[%c0_2, %c0_3] : memref<2x32xf32, #tpu.memory_space<vmem>>, vector<1x32xf32>
    %c1 = arith.constant 1 : index
    %c0_4 = arith.constant 0 : index
    %5 = vector.load %arg3[%c1, %c0_4] : memref<2x32xf32, #tpu.memory_space<vmem>>, vector<1x32xf32>
    %c0_5 = arith.constant 0 : index
    %c0_6 = arith.constant 0 : index
    %c0_7 = arith.constant 0 : index
    %6 = vector.load %arg4[%c0_5, %c0_6, %c0_7] : memref<1x1x32xf32, #tpu.memory_space<vmem>>, vector<1x1x32xf32>
    %7 = vector.shape_cast %6 : vector<1x1x32xf32> to vector<1x32xf32>
    %8 = vector.broadcast %2 : vector<256x1xf32> to vector<256x32xf32>
    %9 = vector.broadcast %4 : vector<1x32xf32> to vector<256x32xf32>
    %10 = arith.mulf %8, %9 : vector<256x32xf32>
    %11 = vector.broadcast %3 : vector<256x1xf32> to vector<256x32xf32>
    %12 = vector.broadcast %5 : vector<1x32xf32> to vector<256x32xf32>
    %13 = arith.mulf %11, %12 : vector<256x32xf32>
    %14 = arith.addf %10, %13 : vector<256x32xf32>
    %15 = vector.broadcast %7 : vector<1x32xf32> to vector<256x32xf32>
    %16 = arith.addf %14, %15 : vector<256x32xf32>
    %17 = math.tanh %16 : vector<256x32xf32>
    %c0_8 = arith.constant 0 : index
    %c0_9 = arith.constant 0 : index
    %c0_10 = arith.constant 0 : index
    %18 = vector.load %arg5[%c0_8, %c0_9, %c0_10] : memref<1x256x32xf32, #tpu.memory_space<vmem>>, vector<1x256x32xf32>
    %19 = vector.shape_cast %18 : vector<1x256x32xf32> to vector<256x32xf32>
    %20 = vector.shape_cast %17 : vector<256x32xf32> to vector<1x256x32xf32>
    tpu.vector_store %arg5[%c0_8, %c0_9, %c0_10], %20 {strides = array<i32>} : memref<1x256x32xf32, #tpu.memory_space<vmem>>, vector<1x256x32xf32>,
    return
  }
  func.func @transform_0(%arg0: i32, %arg1: i32) -> (i32, i32, i32) {
    %c0_i32 = arith.constant 0 : i32
    %c0_i32_0 = arith.constant 0 : i32
    return %arg0, %arg1, %c0_i32 : i32, i32, i32
  }
  func.func @transform_1(%arg0: i32, %arg1: i32) -> (i32, i32) {
    %c0_i32 = arith.constant 0 : i32
    %c0_i32_0 = arith.constant 0 : i32
    %c0_i32_1 = arith.constant 0 : i32
    return %c0_i32, %c0_i32_0 : i32, i32
  }
  func.func @transform_2(%arg0: i32, %arg1: i32) -> (i32, i32, i32) {
    %c0_i32 = arith.constant 0 : i32
    %c0_i32_0 = arith.constant 0 : i32
    %c0_i32_1 = arith.constant 0 : i32
    return %arg0, %c0_i32, %c0_i32_0 : i32, i32, i32
  }
  func.func @transform_3(%arg0: i32, %arg1: i32) -> (i32, i32, i32) {
    %c0_i32 = arith.constant 0 : i32
    %c0_i32_0 = arith.constant 0 : i32
    return %arg0, %arg1, %c0_i32 : i32, i32, i32
  }
}

</mosaic_0001>

<llo_original>
// kernel: tpu_custom_call.1
$region0: #{tpu_custom_call.1}
  #allocation0 [shape = 'u32[]', space=smem, size = 0x4, offset = 0x4, fixed_abs, tag = 'smem constant byte address 0x4 - core index']
  #allocation1 [shape = 'u32[144,128]{1,0:T(1,128)}', space=vmem, size = 0x12000, scoped, tag = 'internal scratch']
  %s0 = inlined_call_operand.vmem [shape: f32[2,256,2], index: 0, kind: input, shape index: {}]
  %s1 = inlined_call_operand.vmem [shape: f32[2,32], index: 1, kind: input, shape index: {}]
  %s2 = inlined_call_operand.vmem [shape: f32[2,1,32], index: 2, kind: input, shape index: {}]
  %s3 = inlined_call_operand.vmem [shape: f32[2,256,32], index: 3, kind: output, shape index: {}]
  %s4 = sld [smem:[#allocation0]]
  $region45: #{tpu_custom_call.1} parent=0
    _
  %s6 = ssub.s32 1, %s4
  %s7 = scalar_select 0, %s6, %s4
  loop: start=0, step=1, limit=4
  $region2: #{tpu_custom_call.1} parent=0 // loop_pre_header
    _
  $region3: #{tpu_custom_call.1} parent=0 // loop_header
    %s9 = sphi 0, %s13
    %p10 = scmp.ge.s32.totalorder %s9, 4
    %s16 = sphi 0, %s28
    %s17 = sphi 0, %s24
    %s18 = sphi 0, %s16
    %s19 = sphi 0, %s17
    %s20 = sphi 0, %s18
    %s21 = sphi 0, %s19
    %s33 = sphi 0, %s35
    %s36 = sphi 0, %s33
    %s37 = sphi 0, %s36
    %s53 = sphi 0, %s37
    %s57 = sphi 0, %s57
    %s59 = sphi 0, %s57
    %s60 = sphi 0, %s59
    %s74 = sphi 0, %s60
    %s80 = sphi 0, %s82
    %s83 = sphi 0, %s80
    %s84 = sphi 0, %s83
    %s100 = sphi 0, %s84
    %s108 = sphi 0, %s110
    %s111 = sphi 0, %s108
    %s112 = sphi 0, %s111
    %s128 = sphi 0, %s112
  $region4: #{tpu_custom_call.1} parent=0 // loop_header_branch
    %12 = sbr.rel (%p10) target = $region8
  $region5: #{tpu_custom_call.1} parent=0 // loop_body
    %s14 = ssub.s32 %s9, 1
    %s15 = ssub.s32 %s9, 2
    %s22 = sadd.s32 1, %s17
    %p23 = scmp.ge.s32.totalorder %s22, 1
    %s24 = scalar_select %p23, 0, %s22
    %s25 = sadd.s32 1, %s16
    %s26 = scalar_select %p23, %s25, %s16
    %p27 = scmp.ge.s32.totalorder %s26, 2
    %s28 = scalar_select %p27, 0, %s26
    %s29 = ssub.s32 %s16, %s28
    %s30 = ssub.s32 %s17, %s24
    %s31 = sor.u32 %s29, %s30
    %p32 = scmp.eq.s32.totalorder %s31, 0
    %s34 = sadd.s32 %s33, 1
    %s35 = scalar_select %p32, %s33, %s34
    %p38 = pneg %p32
    %p39 = scmp.eq.s32.totalorder %s9, 1
    %p40 = por %p38, %p39
    %p41 = scmp.ne.s32.totalorder %s33, %s36
    %p42 = scmp.eq.s32.totalorder %s9, 0
    %p43 = por %p41, %p42
    %p44 = scmp.ne.s32.totalorder %s33, %s36
    %p45 = scmp.eq.s32.totalorder %s14, 1
    %p46 = por %p44, %p45
    %p47 = scmp.ne.s32.totalorder %s36, %s37
    %p48 = scmp.eq.s32.totalorder %s14, 0
    %p49 = por %p47, %p48
    %p50 = scmp.ne.s32.totalorder %s36, %s37
    %p51 = scmp.eq.s32.totalorder %s15, 1
    %p52 = por %p50, %p51
    %p54 = scmp.ne.s32.totalorder %s37, %s53
    %p55 = scmp.eq.s32.totalorder %s15, 0
    %p56 = por %p54, %p55
    %s58 = sadd.s32 %s57, 1
    %p61 = scmp.eq.s32.totalorder %s9, 1
    %p62 = scmp.ne.s32.totalorder %s57, %s59
    %p63 = scmp.eq.s32.totalorder %s9, 0
    %p64 = por %p62, %p63
    %p65 = scmp.ne.s32.totalorder %s57, %s59
    %p66 = scmp.eq.s32.totalorder %s14, 1
    %p67 = por %p65, %p66
    %p68 = scmp.ne.s32.totalorder %s59, %s60
    %p69 = scmp.eq.s32.totalorder %s14, 0
    %p70 = por %p68, %p69
    %p71 = scmp.ne.s32.totalorder %s59, %s60
    %p72 = scmp.eq.s32.totalorder %s15, 1
    %p73 = por %p71, %p72
    %p75 = scmp.ne.s32.totalorder %s60, %s74
    %p76 = scmp.eq.s32.totalorder %s15, 0
    %p77 = por %p75, %p76
    %s78 = ssub.s32 %s16, %s28
    %p79 = scmp.eq.s32.totalorder %s78, 0
    %s81 = sadd.s32 %s80, 1
    %s82 = scalar_select %p79, %s80, %s81
    %p85 = pneg %p79
    %p86 = scmp.eq.s32.totalorder %s9, 1
    %p87 = por %p85, %p86
    %p88 = scmp.ne.s32.totalorder %s80, %s83
    %p89 = scmp.eq.s32.totalorder %s9, 0
    %p90 = por %p88, %p89
    %p91 = scmp.ne.s32.totalorder %s80, %s83
    %p92 = scmp.eq.s32.totalorder %s14, 1
    %p93 = por %p91, %p92
    %p94 = scmp.ne.s32.totalorder %s83, %s84
    %p95 = scmp.eq.s32.totalorder %s14, 0
    %p96 = por %p94, %p95
    %p97 = scmp.ne.s32.totalorder %s83, %s84
    %p98 = scmp.eq.s32.totalorder %s15, 1
    %p99 = por %p97, %p98
    %p101 = scmp.ne.s32.totalorder %s84, %s100
    %p102 = scmp.eq.s32.totalorder %s15, 0
    %p103 = por %p101, %p102
    %s104 = ssub.s32 %s16, %s28
    %s105 = ssub.s32 %s17, %s24
    %s106 = sor.u32 %s104, %s105
    %p107 = scmp.eq.s32.totalorder %s106, 0
    %s109 = sadd.s32 %s108, 1
    %s110 = scalar_select %p107, %s108, %s109
    %p113 = pneg %p107
    %p114 = scmp.eq.s32.totalorder %s9, 1
    %p115 = por %p113, %p114
    %p116 = scmp.ne.s32.totalorder %s108, %s111
    %p117 = scmp.eq.s32.totalorder %s9, 0
    %p118 = por %p116, %p117
    %p119 = scmp.ne.s32.totalorder %s108, %s111
    %p120 = scmp.eq.s32.totalorder %s14, 1
    %p121 = por %p119, %p120
    %p122 = scmp.ne.s32.totalorder %s111, %s112
    %p123 = scmp.eq.s32.totalorder %s14, 0
    %p124 = por %p122, %p123
    %p125 = scmp.ne.s32.totalorder %s111, %s112
    %p126 = scmp.eq.s32.totalorder %s15, 1
    %p127 = por %p125, %p126
    %p129 = scmp.ne.s32.totalorder %s112, %s128
    %p130 = scmp.eq.s32.totalorder %s15, 0
    %p131 = por %p129, %p130
    %p132 = scmp.le.s32.totalorder 1, %s9
    %p133 = scmp.lt.s32.totalorder %s9, 3
    %p134 = pnand %p132, %p133
    %p135 = pneg %p134
    // Predicated region
    $region9: #{tpu_custom_call.1} parent=5 // pred_check
      _
    $region10: #{tpu_custom_call.1} parent=5 // pred_check_branch
      %137 = sbr.rel (%p134) target = $region12
    $region11: #{tpu_custom_call.1} parent=5 // pred_region
      %s138 = ssub.s32 %s9, 1
      // Predicated region
      $region13: #{tpu_custom_call.1} parent=11 // pred_check
        %p139 = pneg %p70
      $region14: #{tpu_custom_call.1} parent=11 // pred_check_branch
        %141 = sbr.rel (%p139) target = $region16
      $region15: #{tpu_custom_call.1} parent=11 // pred_region
        _
      $region16: #{tpu_custom_call.1} parent=11 // pred_fallthru
        _
    $region12: #{tpu_custom_call.1} parent=5 // pred_fallthru
      _
    %p142 = scmp.lt.s32.totalorder %s9, 2
    // Predicated region
    $region17: #{tpu_custom_call.1} parent=5 // pred_check
      %p143 = pneg %p142
    $region18: #{tpu_custom_call.1} parent=5 // pred_check_branch
      %145 = sbr.rel (%p143) target = $region20
    $region19: #{tpu_custom_call.1} parent=5 // pred_region
      // Predicated region
      $region21: #{tpu_custom_call.1} parent=19 // pred_check
        %p146 = pneg %p43
      $region22: #{tpu_custom_call.1} parent=19 // pred_check_branch
        %148 = sbr.rel (%p146) target = $region24
      $region23: #{tpu_custom_call.1} parent=19 // pred_region
        %s149 = smul.u32 32, %s17
        %p150 = scmp.lt.s32.totalorder %s16, 1
        %s151 = scalar_select %p150, %s16, 1
        %p152 = scmp.lt.s32.totalorder %s149, 31
        %s153 = scalar_select %p152, %s149, 31
        %s154 = smul.addr %s151, 32
        %s155 = sadd.s32 %s153, %s154
        %s156 = smul.addr %s155, 8
        %s157 = scalar_lea.vmem %s0, %s156
        %s158 = smul.u32 32, %s17
      $region24: #{tpu_custom_call.1} parent=19 // pred_fallthru
        _
      // Predicated region
      $region25: #{tpu_custom_call.1} parent=19 // pred_check
        %p159 = pneg %p90
      $region26: #{tpu_custom_call.1} parent=19 // pred_check_branch
        %161 = sbr.rel (%p159) target = $region28
      $region27: #{tpu_custom_call.1} parent=19 // pred_region
        %p162 = scmp.lt.s32.totalorder %s16, 1
        %s163 = scalar_select %p162, %s16, 1
        %s164 = scalar_lea.vmem %s2, %s163
      $region28: #{tpu_custom_call.1} parent=19 // pred_fallthru
        _
    $region20: #{tpu_custom_call.1} parent=5 // pred_fallthru
      _
    %p165 = scmp.le.s32.totalorder 1, %s9
    %p166 = scmp.lt.s32.totalorder %s9, 3
    %p167 = pnand %p165, %p166
    %p168 = pneg %p167
    // Predicated region
    $region29: #{tpu_custom_call.1} parent=5 // pred_check
      _
    $region30: #{tpu_custom_call.1} parent=5 // pred_check_branch
      %170 = sbr.rel (%p167) target = $region32
    $region31: #{tpu_custom_call.1} parent=5 // pred_region
      %s171 = ssub.s32 %s9, 1
      %s172 = smul.u32 32, %s19
      %p173 = scmp.lt.s32.totalorder %s18, 1
      %s174 = scalar_select %p173, %s18, 1
      %p175 = scmp.lt.s32.totalorder %s172, 31
      %s176 = scalar_select %p175, %s172, 31
      %s177 = smul.addr %s174, 32
      %s178 = sadd.s32 %s176, %s177
      %s179 = smul.addr %s178, 8
      %s180 = scalar_lea.vmem %s0, %s179
      %p181 = pneg %p49
      %p182 = pneg %p46
      %p183 = pneg %p70
      %p184 = pneg %p67
      %p185 = scmp.lt.s32.totalorder %s18, 1
      %s186 = scalar_select %p185, %s18, 1
      %s187 = scalar_lea.vmem %s2, %s186
      %p188 = pneg %p96
      %p189 = pneg %p93
      %p190 = pneg %p124
      %p191 = pneg %p121
      %s192 = smul.u32 32, %s19
      %p193 = scmp.lt.s32.totalorder %s18, 1
      %s194 = scalar_select %p193, %s18, 1
      %p195 = scmp.lt.s32.totalorder %s192, 31
      %s196 = scalar_select %p195, %s192, 31
      %s197 = smul.addr %s194, 32
      %s198 = sadd.s32 %s196, %s197
      %s199 = smul.addr %s198, 8
      %s200 = scalar_lea.vmem %s3, %s199
      %s201 = smul.u32 32, %s19
      %p202 = scmp.lt.s32.totalorder %s18, 1
      %s203 = scalar_select %p202, %s18, 1
      %p204 = scmp.lt.s32.totalorder %s201, 31
      %s205 = scalar_select %p204, %s201, 31
      %s206 = smul.addr %s203, 32
      %s207 = sadd.s32 %s205, %s206
      %s208 = smul.addr %s207, 8
      %s209 = scalar_lea.vmem %s0, %s208
      %s210 = smul.u32 32, %s19
      %p211 = scmp.lt.s32.totalorder %s18, 1
      %s212 = scalar_select %p211, %s18, 1
      %s213 = scalar_lea.vmem %s2, %s212
      %s214 = smul.u32 32, %s19
      %p215 = scmp.lt.s32.totalorder %s18, 1
      %s216 = scalar_select %p215, %s18, 1
      %p217 = scmp.lt.s32.totalorder %s214, 31
      %s218 = scalar_select %p217, %s214, 31
      %s219 = smul.addr %s216, 32
      %s220 = sadd.s32 %s218, %s219
      %s221 = smul.addr %s220, 8
      %s222 = scalar_lea.vmem %s3, %s221
      %s223 = smul.u32 32, %s19
      %v224 = vld [vmem:[%s209] sm:$0xff]
      %v225 = vld [vmem:[%s209 + $0x8] sm:$0xff]
      %v226 = vld [vmem:[%s209 + $0x10] sm:$0xff]
      %v227 = vld [vmem:[%s209 + $0x18] sm:$0xff]
      %v228 = vld [vmem:[%s209 + $0x20] sm:$0xff]
      %v229 = vld [vmem:[%s209 + $0x28] sm:$0xff]
      %v230 = vld [vmem:[%s209 + $0x30] sm:$0xff]
      %v231 = vld [vmem:[%s209 + $0x38] sm:$0xff]
      %v232 = vld [vmem:[%s209 + $0x40] sm:$0xff]
      %v233 = vld [vmem:[%s209 + $0x48] sm:$0xff]
      %v234 = vld [vmem:[%s209 + $0x50] sm:$0xff]
      %v235 = vld [vmem:[%s209 + $0x58] sm:$0xff]
      %v236 = vld [vmem:[%s209 + $0x60] sm:$0xff]
      %v237 = vld [vmem:[%s209 + $0x68] sm:$0xff]
      %v238 = vld [vmem:[%s209 + $0x70] sm:$0xff]
      %v239 = vld [vmem:[%s209 + $0x78] sm:$0xff]
      %v240 = vld [vmem:[%s209 + $0x80] sm:$0xff]
      %v241 = vld [vmem:[%s209 + $0x88] sm:$0xff]
      %v242 = vld [vmem:[%s209 + $0x90] sm:$0xff]
      %v243 = vld [vmem:[%s209 + $0x98] sm:$0xff]
      %v244 = vld [vmem:[%s209 + $0xa0] sm:$0xff]
      %v245 = vld [vmem:[%s209 + $0xa8] sm:$0xff]
      %v246 = vld [vmem:[%s209 + $0xb0] sm:$0xff]
      %v247 = vld [vmem:[%s209 + $0xb8] sm:$0xff]
      %v248 = vld [vmem:[%s209 + $0xc0] sm:$0xff]
      %v249 = vld [vmem:[%s209 + $0xc8] sm:$0xff]
      %v250 = vld [vmem:[%s209 + $0xd0] sm:$0xff]
      %v251 = vld [vmem:[%s209 + $0xd8] sm:$0xff]
      %v252 = vld [vmem:[%s209 + $0xe0] sm:$0xff]
      %v253 = vld [vmem:[%s209 + $0xe8] sm:$0xff]
      %v254 = vld [vmem:[%s209 + $0xf0] sm:$0xff]
      %v255 = vld [vmem:[%s209 + $0xf8] sm:$0xff]
      %v256 = vld [vmem:[%s1] sm:$0x1]
      %v257 = vld [vmem:[%s1 + $0x1] sm:$0x1]
      %v258 = vld [vmem:[%s213] sm:$0x1]
      %260 = vset.pattern.permute.xlu0 0
      %261 = vperm.xlu0 %260, %v224
      %v262 = vpop.permute.xlu0 %261
      %265 = vset.pattern.permute.xlu0 0
      %266 = vperm.xlu0 %265, %v225
      %v267 = vpop.permute.xlu0 %266
      %270 = vset.pattern.permute.xlu0 0
      %271 = vperm.xlu0 %270, %v226
      %v272 = vpop.permute.xlu0 %271
      %275 = vset.pattern.permute.xlu0 0
      %276 = vperm.xlu0 %275, %v227
      %v277 = vpop.permute.xlu0 %276
      %280 = vset.pattern.permute.xlu0 0
      %281 = vperm.xlu0 %280, %v228
      %v282 = vpop.permute.xlu0 %281
      %285 = vset.pattern.permute.xlu0 0
      %286 = vperm.xlu0 %285, %v229
      %v287 = vpop.permute.xlu0 %286
      %290 = vset.pattern.permute.xlu0 0
      %291 = vperm.xlu0 %290, %v230
      %v292 = vpop.permute.xlu0 %291
      %295 = vset.pattern.permute.xlu0 0
      %296 = vperm.xlu0 %295, %v231
      %v297 = vpop.permute.xlu0 %296
      %300 = vset.pattern.permute.xlu0 0
      %301 = vperm.xlu0 %300, %v232
      %v302 = vpop.permute.xlu0 %301
      %305 = vset.pattern.permute.xlu0 0
      %306 = vperm.xlu0 %305, %v233
      %v307 = vpop.permute.xlu0 %306
      %310 = vset.pattern.permute.xlu0 0
      %311 = vperm.xlu0 %310, %v234
      %v312 = vpop.permute.xlu0 %311
      %315 = vset.pattern.permute.xlu0 0
      %316 = vperm.xlu0 %315, %v235
      %v317 = vpop.permute.xlu0 %316
      %320 = vset.pattern.permute.xlu0 0
      %321 = vperm.xlu0 %320, %v236
      %v322 = vpop.permute.xlu0 %321
      %325 = vset.pattern.permute.xlu0 0
      %326 = vperm.xlu0 %325, %v237
      %v327 = vpop.permute.xlu0 %326
      %330 = vset.pattern.permute.xlu0 0
      %331 = vperm.xlu0 %330, %v238
      %v332 = vpop.permute.xlu0 %331
      %335 = vset.pattern.permute.xlu0 0
      %336 = vperm.xlu0 %335, %v239
      %v337 = vpop.permute.xlu0 %336
      %340 = vset.pattern.permute.xlu0 0
      %341 = vperm.xlu0 %340, %v240
      %v342 = vpop.permute.xlu0 %341
      %345 = vset.pattern.permute.xlu0 0
      %346 = vperm.xlu0 %345, %v241
      %v347 = vpop.permute.xlu0 %346
      %350 = vset.pattern.permute.xlu0 0
      %351 = vperm.xlu0 %350, %v242
      %v352 = vpop.permute.xlu0 %351
      %355 = vset.pattern.permute.xlu0 0
      %356 = vperm.xlu0 %355, %v243
      %v357 = vpop.permute.xlu0 %356
      %360 = vset.pattern.permute.xlu0 0
      %361 = vperm.xlu0 %360, %v244
      %v362 = vpop.permute.xlu0 %361
      %365 = vset.pattern.permute.xlu0 0
      %366 = vperm.xlu0 %365, %v245
      %v367 = vpop.permute.xlu0 %366
      %370 = vset.pattern.permute.xlu0 0
      %371 = vperm.xlu0 %370, %v246
      %v372 = vpop.permute.xlu0 %371
      %375 = vset.pattern.permute.xlu0 0
      %376 = vperm.xlu0 %375, %v247
      %v377 = vpop.permute.xlu0 %376
      %380 = vset.pattern.permute.xlu0 0
      %381 = vperm.xlu0 %380, %v248
      %v382 = vpop.permute.xlu0 %381
      %385 = vset.pattern.permute.xlu0 0
      %386 = vperm.xlu0 %385, %v249
      %v387 = vpop.permute.xlu0 %386
      %390 = vset.pattern.permute.xlu0 0
      %391 = vperm.xlu0 %390, %v250
      %v392 = vpop.permute.xlu0 %391
      %395 = vset.pattern.permute.xlu0 0
      %396 = vperm.xlu0 %395, %v251
      %v397 = vpop.permute.xlu0 %396
      %400 = vset.pattern.permute.xlu0 0
      %401 = vperm.xlu0 %400, %v252
      %v402 = vpop.permute.xlu0 %401
      %405 = vset.pattern.permute.xlu0 0
      %406 = vperm.xlu0 %405, %v253
      %v407 = vpop.permute.xlu0 %406
      %410 = vset.pattern.permute.xlu0 0
      %411 = vperm.xlu0 %410, %v254
      %v412 = vpop.permute.xlu0 %411
      %415 = vset.pattern.permute.xlu0 0
      %416 = vperm.xlu0 %415, %v255
      %v417 = vpop.permute.xlu0 %416
      %v419 = vlaneseq
      %v420 = vshrl.u32 %v419, 7
      %v421 = vsub.s32 0, %v420
      %v422 = vrot.slane %v256, %v421
      %v423 = vmul.f32 %v262, %v422
      %v424 = vmul.f32 %v267, %v422
      %v425 = vmul.f32 %v272, %v422
      %v426 = vmul.f32 %v277, %v422
      %v427 = vmul.f32 %v282, %v422
      %v428 = vmul.f32 %v287, %v422
      %v429 = vmul.f32 %v292, %v422
      %v430 = vmul.f32 %v297, %v422
      %v431 = vmul.f32 %v302, %v422
      %v432 = vmul.f32 %v307, %v422
      %v433 = vmul.f32 %v312, %v422
      %v434 = vmul.f32 %v317, %v422
      %v435 = vmul.f32 %v322, %v422
      %v436 = vmul.f32 %v327, %v422
      %v437 = vmul.f32 %v332, %v422
      %v438 = vmul.f32 %v337, %v422
      %v439 = vmul.f32 %v342, %v422
      %v440 = vmul.f32 %v347, %v422
      %v441 = vmul.f32 %v352, %v422
      %v442 = vmul.f32 %v357, %v422
      %v443 = vmul.f32 %v362, %v422
      %v444 = vmul.f32 %v367, %v422
      %v445 = vmul.f32 %v372, %v422
      %v446 = vmul.f32 %v377, %v422
      %v447 = vmul.f32 %v382, %v422
      %v448 = vmul.f32 %v387, %v422
      %v449 = vmul.f32 %v392, %v422
      %v450 = vmul.f32 %v397, %v422
      %v451 = vmul.f32 %v402, %v422
      %v452 = vmul.f32 %v407, %v422
      %v453 = vmul.f32 %v412, %v422
      %v454 = vmul.f32 %v417, %v422
      %455 = vset.pattern.permute.xlu0 1
      %456 = vperm.xlu0 %455, %v224
      %v457 = vpop.permute.xlu0 %456
      %459 = vset.pattern.permute.xlu0 1
      %460 = vperm.xlu0 %459, %v225
      %v461 = vpop.permute.xlu0 %460
      %463 = vset.pattern.permute.xlu0 1
      %464 = vperm.xlu0 %463, %v226
      %v465 = vpop.permute.xlu0 %464
      %467 = vset.pattern.permute.xlu0 1
      %468 = vperm.xlu0 %467, %v227
      %v469 = vpop.permute.xlu0 %468
      %471 = vset.pattern.permute.xlu0 1
      %472 = vperm.xlu0 %471, %v228
      %v473 = vpop.permute.xlu0 %472
      %475 = vset.pattern.permute.xlu0 1
      %476 = vperm.xlu0 %475, %v229
      %v477 = vpop.permute.xlu0 %476
      %479 = vset.pattern.permute.xlu0 1
      %480 = vperm.xlu0 %479, %v230
      %v481 = vpop.permute.xlu0 %480
      %483 = vset.pattern.permute.xlu0 1
      %484 = vperm.xlu0 %483, %v231
      %v485 = vpop.permute.xlu0 %484
      %487 = vset.pattern.permute.xlu0 1
      %488 = vperm.xlu0 %487, %v232
      %v489 = vpop.permute.xlu0 %488
      %491 = vset.pattern.permute.xlu0 1
      %492 = vperm.xlu0 %491, %v233
      %v493 = vpop.permute.xlu0 %492
      %495 = vset.pattern.permute.xlu0 1
      %496 = vperm.xlu0 %495, %v234
      %v497 = vpop.permute.xlu0 %496
      %499 = vset.pattern.permute.xlu0 1
      %500 = vperm.xlu0 %499, %v235
      %v501 = vpop.permute.xlu0 %500
      %503 = vset.pattern.permute.xlu0 1
      %504 = vperm.xlu0 %503, %v236
      %v505 = vpop.permute.xlu0 %504
      %507 = vset.pattern.permute.xlu0 1
      %508 = vperm.xlu0 %507, %v237
      %v509 = vpop.permute.xlu0 %508
      %511 = vset.pattern.permute.xlu0 1
      %512 = vperm.xlu0 %511, %v238
      %v513 = vpop.permute.xlu0 %512
      %515 = vset.pattern.permute.xlu0 1
      %516 = vperm.xlu0 %515, %v239
      %v517 = vpop.permute.xlu0 %516
      %519 = vset.pattern.permute.xlu0 1
      %520 = vperm.xlu0 %519, %v240
      %v521 = vpop.permute.xlu0 %520
      %523 = vset.pattern.permute.xlu0 1
      %524 = vperm.xlu0 %523, %v241
      %v525 = vpop.permute.xlu0 %524
      %527 = vset.pattern.permute.xlu0 1
      %528 = vperm.xlu0 %527, %v242
      %v529 = vpop.permute.xlu0 %528
      %531 = vset.pattern.permute.xlu0 1
      %532 = vperm.xlu0 %531, %v243
      %v533 = vpop.permute.xlu0 %532
      %535 = vset.pattern.permute.xlu0 1
      %536 = vperm.xlu0 %535, %v244
      %v537 = vpop.permute.xlu0 %536
      %539 = vset.pattern.permute.xlu0 1
      %540 = vperm.xlu0 %539, %v245
      %v541 = vpop.permute.xlu0 %540
      %543 = vset.pattern.permute.xlu0 1
      %544 = vperm.xlu0 %543, %v246
      %v545 = vpop.permute.xlu0 %544
      %547 = vset.pattern.permute.xlu0 1
      %548 = vperm.xlu0 %547, %v247
      %v549 = vpop.permute.xlu0 %548
      %551 = vset.pattern.permute.xlu0 1
      %552 = vperm.xlu0 %551, %v248
      %v553 = vpop.permute.xlu0 %552
      %555 = vset.pattern.permute.xlu0 1
      %556 = vperm.xlu0 %555, %v249
      %v557 = vpop.permute.xlu0 %556
      %559 = vset.pattern.permute.xlu0 1
      %560 = vperm.xlu0 %559, %v250
      %v561 = vpop.permute.xlu0 %560
      %563 = vset.pattern.permute.xlu0 1
      %564 = vperm.xlu0 %563, %v251
      %v565 = vpop.permute.xlu0 %564
      %567 = vset.pattern.permute.xlu0 1
      %568 = vperm.xlu0 %567, %v252
      %v569 = vpop.permute.xlu0 %568
      %571 = vset.pattern.permute.xlu0 1
      %572 = vperm.xlu0 %571, %v253
      %v573 = vpop.permute.xlu0 %572
      %575 = vset.pattern.permute.xlu0 1
      %576 = vperm.xlu0 %575, %v254
      %v577 = vpop.permute.xlu0 %576
      %579 = vset.pattern.permute.xlu0 1
      %580 = vperm.xlu0 %579, %v255
      %v581 = vpop.permute.xlu0 %580
      %v583 = vlaneseq
      %v584 = vshrl.u32 %v583, 7
      %v585 = vsub.s32 0, %v584
      %v586 = vrot.slane %v257, %v585
      %v587 = vmul.f32 %v457, %v586
      %v588 = vmul.f32 %v461, %v586
      %v589 = vmul.f32 %v465, %v586
      %v590 = vmul.f32 %v469, %v586
      %v591 = vmul.f32 %v473, %v586
      %v592 = vmul.f32 %v477, %v586
      %v593 = vmul.f32 %v481, %v586
      %v594 = vmul.f32 %v485, %v586
      %v595 = vmul.f32 %v489, %v586
      %v596 = vmul.f32 %v493, %v586
      %v597 = vmul.f32 %v497, %v586
      %v598 = vmul.f32 %v501, %v586
      %v599 = vmul.f32 %v505, %v586
      %v600 = vmul.f32 %v509, %v586
      %v601 = vmul.f32 %v513, %v586
      %v602 = vmul.f32 %v517, %v586
      %v603 = vmul.f32 %v521, %v586
      %v604 = vmul.f32 %v525, %v586
      %v605 = vmul.f32 %v529, %v586
      %v606 = vmul.f32 %v533, %v586
      %v607 = vmul.f32 %v537, %v586
      %v608 = vmul.f32 %v541, %v586
      %v609 = vmul.f32 %v545, %v586
      %v610 = vmul.f32 %v549, %v586
      %v611 = vmul.f32 %v553, %v586
      %v612 = vmul.f32 %v557, %v586
      %v613 = vmul.f32 %v561, %v586
      %v614 = vmul.f32 %v565, %v586
      %v615 = vmul.f32 %v569, %v586
      %v616 = vmul.f32 %v573, %v586
      %v617 = vmul.f32 %v577, %v586
      %v618 = vmul.f32 %v581, %v586
      %v619 = vadd.f32 %v423, %v587
      %v620 = vadd.f32 %v424, %v588
      %v621 = vadd.f32 %v425, %v589
      %v622 = vadd.f32 %v426, %v590
      %v623 = vadd.f32 %v427, %v591
      %v624 = vadd.f32 %v428, %v592
      %v625 = vadd.f32 %v429, %v593
      %v626 = vadd.f32 %v430, %v594
      %v627 = vadd.f32 %v431, %v595
      %v628 = vadd.f32 %v432, %v596
      %v629 = vadd.f32 %v433, %v597
      %v630 = vadd.f32 %v434, %v598
      %v631 = vadd.f32 %v435, %v599
      %v632 = vadd.f32 %v436, %v600
      %v633 = vadd.f32 %v437, %v601
      %v634 = vadd.f32 %v438, %v602
      %v635 = vadd.f32 %v439, %v603
      %v636 = vadd.f32 %v440, %v604
      %v637 = vadd.f32 %v441, %v605
      %v638 = vadd.f32 %v442, %v606
      %v639 = vadd.f32 %v443, %v607
      %v640 = vadd.f32 %v444, %v608
      %v641 = vadd.f32 %v445, %v609
      %v642 = vadd.f32 %v446, %v610
      %v643 = vadd.f32 %v447, %v611
      %v644 = vadd.f32 %v448, %v612
      %v645 = vadd.f32 %v449, %v613
      %v646 = vadd.f32 %v450, %v614
      %v647 = vadd.f32 %v451, %v615
      %v648 = vadd.f32 %v452, %v616
      %v649 = vadd.f32 %v453, %v617
      %v650 = vadd.f32 %v454, %v618
      %v652 = vlaneseq
      %v653 = vshrl.u32 %v652, 7
      %v654 = vsub.s32 0, %v653
      %v655 = vrot.slane %v258, %v654
      %v657 = vadd.f32 %v619, %v655
      %v658 = vadd.f32 %v620, %v655
      %v659 = vadd.f32 %v621, %v655
      %v660 = vadd.f32 %v622, %v655
      %v661 = vadd.f32 %v623, %v655
      %v662 = vadd.f32 %v624, %v655
      %v663 = vadd.f32 %v625, %v655
      %v664 = vadd.f32 %v626, %v655
      %v665 = vadd.f32 %v627, %v655
      %v666 = vadd.f32 %v628, %v655
      %v667 = vadd.f32 %v629, %v655
      %v668 = vadd.f32 %v630, %v655
      %v669 = vadd.f32 %v631, %v655
      %v670 = vadd.f32 %v632, %v655
      %v671 = vadd.f32 %v633, %v655
      %v672 = vadd.f32 %v634, %v655
      %v673 = vadd.f32 %v635, %v655
      %v674 = vadd.f32 %v636, %v655
      %v675 = vadd.f32 %v637, %v655
      %v676 = vadd.f32 %v638, %v655
      %v677 = vadd.f32 %v639, %v655
      %v678 = vadd.f32 %v640, %v655
      %v679 = vadd.f32 %v641, %v655
      %v680 = vadd.f32 %v642, %v655
      %v681 = vadd.f32 %v643, %v655
      %v682 = vadd.f32 %v644, %v655
      %v683 = vadd.f32 %v645, %v655
      %v684 = vadd.f32 %v646, %v655
      %v685 = vadd.f32 %v647, %v655
      %v686 = vadd.f32 %v648, %v655
      %v687 = vadd.f32 %v649, %v655
      %v688 = vadd.f32 %v650, %v655
      %v689 = vtanh.pop %v657
      %v690 = vtanh.pop %v658
      %v691 = vtanh.pop %v659
      %v692 = vtanh.pop %v660
      %v693 = vtanh.pop %v661
      %v694 = vtanh.pop %v662
      %v695 = vtanh.pop %v663
      %v696 = vtanh.pop %v664
      %v697 = vtanh.pop %v665
      %v698 = vtanh.pop %v666
      %v699 = vtanh.pop %v667
      %v700 = vtanh.pop %v668
      %v701 = vtanh.pop %v669
      %v702 = vtanh.pop %v670
      %v703 = vtanh.pop %v671
      %v704 = vtanh.pop %v672
      %v705 = vtanh.pop %v673
      %v706 = vtanh.pop %v674
      %v707 = vtanh.pop %v675
      %v708 = vtanh.pop %v676
      %v709 = vtanh.pop %v677
      %v710 = vtanh.pop %v678
      %v711 = vtanh.pop %v679
      %v712 = vtanh.pop %v680
      %v713 = vtanh.pop %v681
      %v714 = vtanh.pop %v682
      %v715 = vtanh.pop %v683
      %v716 = vtanh.pop %v684
      %v717 = vtanh.pop %v685
      %v718 = vtanh.pop %v686
      %v719 = vtanh.pop %v687
      %v720 = vtanh.pop %v688
      %vm721 = vcmask 261120
      %722 = vst.msk [vmem:[%s222] sm:$0xff] %vm721, %v689
      %723 = vst.msk [vmem:[%s222 + $0x8] sm:$0xff] %vm721, %v690
      %724 = vst.msk [vmem:[%s222 + $0x10] sm:$0xff] %vm721, %v691
      %725 = vst.msk [vmem:[%s222 + $0x18] sm:$0xff] %vm721, %v692
      %726 = vst.msk [vmem:[%s222 + $0x20] sm:$0xff] %vm721, %v693
      %727 = vst.msk [vmem:[%s222 + $0x28] sm:$0xff] %vm721, %v694
      %728 = vst.msk [vmem:[%s222 + $0x30] sm:$0xff] %vm721, %v695
      %729 = vst.msk [vmem:[%s222 + $0x38] sm:$0xff] %vm721, %v696
      %730 = vst.msk [vmem:[%s222 + $0x40] sm:$0xff] %vm721, %v697
      %731 = vst.msk [vmem:[%s222 + $0x48] sm:$0xff] %vm721, %v698
      %732 = vst.msk [vmem:[%s222 + $0x50] sm:$0xff] %vm721, %v699
      %733 = vst.msk [vmem:[%s222 + $0x58] sm:$0xff] %vm721, %v700
      %734 = vst.msk [vmem:[%s222 + $0x60] sm:$0xff] %vm721, %v701
      %735 = vst.msk [vmem:[%s222 + $0x68] sm:$0xff] %vm721, %v702
      %736 = vst.msk [vmem:[%s222 + $0x70] sm:$0xff] %vm721, %v703
      %737 = vst.msk [vmem:[%s222 + $0x78] sm:$0xff] %vm721, %v704
      %738 = vst.msk [vmem:[%s222 + $0x80] sm:$0xff] %vm721, %v705
      %739 = vst.msk [vmem:[%s222 + $0x88] sm:$0xff] %vm721, %v706
      %740 = vst.msk [vmem:[%s222 + $0x90] sm:$0xff] %vm721, %v707
      %741 = vst.msk [vmem:[%s222 + $0x98] sm:$0xff] %vm721, %v708
      %742 = vst.msk [vmem:[%s222 + $0xa0] sm:$0xff] %vm721, %v709
      %743 = vst.msk [vmem:[%s222 + $0xa8] sm:$0xff] %vm721, %v710
      %744 = vst.msk [vmem:[%s222 + $0xb0] sm:$0xff] %vm721, %v711
      %745 = vst.msk [vmem:[%s222 + $0xb8] sm:$0xff] %vm721, %v712
      %746 = vst.msk [vmem:[%s222 + $0xc0] sm:$0xff] %vm721, %v713
      %747 = vst.msk [vmem:[%s222 + $0xc8] sm:$0xff] %vm721, %v714
      %748 = vst.msk [vmem:[%s222 + $0xd0] sm:$0xff] %vm721, %v715
      %749 = vst.msk [vmem:[%s222 + $0xd8] sm:$0xff] %vm721, %v716
      %750 = vst.msk [vmem:[%s222 + $0xe0] sm:$0xff] %vm721, %v717
      %751 = vst.msk [vmem:[%s222 + $0xe8] sm:$0xff] %vm721, %v718
      %752 = vst.msk [vmem:[%s222 + $0xf0] sm:$0xff] %vm721, %v719
      %753 = vst.msk [vmem:[%s222 + $0xf8] sm:$0xff] %vm721, %v720
      %s754 = smul.u32 32, %s19
      %p755 = scmp.lt.s32.totalorder %s18, 1
      %s756 = scalar_select %p755, %s18, 1
      %p757 = scmp.lt.s32.totalorder %s754, 31
      %s758 = scalar_select %p757, %s754, 31
      %s759 = smul.addr %s756, 32
      %s760 = sadd.s32 %s758, %s759
      %s761 = smul.addr %s760, 8
      %s762 = scalar_lea.vmem %s3, %s761
      // Predicated region
      $region33: #{tpu_custom_call.1} parent=31 // pred_check
        %p763 = pneg %p121
      $region34: #{tpu_custom_call.1} parent=31 // pred_check_branch
        %765 = sbr.rel (%p763) target = $region36
      $region35: #{tpu_custom_call.1} parent=31 // pred_region
        %s766 = smul.u32 32, %s19
      $region36: #{tpu_custom_call.1} parent=31 // pred_fallthru
        _
    $region32: #{tpu_custom_call.1} parent=5 // pred_fallthru
      _
    %p767 = scmp.le.s32.totalorder 2, %s9
    // Predicated region
    $region37: #{tpu_custom_call.1} parent=5 // pred_check
      %p768 = pneg %p767
    $region38: #{tpu_custom_call.1} parent=5 // pred_check_branch
      %770 = sbr.rel (%p768) target = $region40
    $region39: #{tpu_custom_call.1} parent=5 // pred_region
      %s771 = ssub.s32 %s9, 2
      // Predicated region
      $region41: #{tpu_custom_call.1} parent=39 // pred_check
        %p772 = pneg %p127
      $region42: #{tpu_custom_call.1} parent=39 // pred_check_branch
        %774 = sbr.rel (%p772) target = $region44
      $region43: #{tpu_custom_call.1} parent=39 // pred_region
        %s775 = smul.u32 32, %s21
        %p776 = scmp.lt.s32.totalorder %s20, 1
        %s777 = scalar_select %p776, %s20, 1
        %p778 = scmp.lt.s32.totalorder %s775, 31
        %s779 = scalar_select %p778, %s775, 31
        %s780 = smul.addr %s777, 32
        %s781 = sadd.s32 %s779, %s780
        %s782 = smul.addr %s781, 8
        %s783 = scalar_lea.vmem %s3, %s782
      $region44: #{tpu_custom_call.1} parent=39 // pred_fallthru
        _
    $region40: #{tpu_custom_call.1} parent=5 // pred_fallthru
      _
  $region6: #{tpu_custom_call.1} parent=0 // loop_footer
    %s13 = sadd.s32 1, %s9
  $region7: #{tpu_custom_call.1} parent=0 // loop_footer_branch
    %8 = sbr.rel target = $region3
  $region8: #{tpu_custom_call.1} parent=0 // loop_exit
    _

</llo_original>
